<compile_context>
chip_gen: v6e
topology: v6e:2x2x1
jax: 0.10.0
libtpu: 0.0.40
codegen_flags: <defaults>
</compile_context>

<pallas_src>
import functools

import jax
import jax.numpy as jnp
from jax.experimental import pallas as pl
from jax.experimental.pallas import tpu as pltpu


def _round_up(x, m):
    return ((x + m - 1) // m) * m


def _vmem_limit_bytes():
    # ~85% of physical VMEM: ~54 MiB on v7x (64 MiB), ~109 MiB on v5e/v6e (128 MiB).
    try:
        cap = pltpu.get_tpu_info().vmem_capacity_bytes
    except Exception:
        cap = 128 * 1024 * 1024
    return int(cap * 0.85)


def _bf16_elementwise_ok():
    # v6e/v7x have bf16 VPU/EUP; v5e does not.
    try:
        kind = jax.devices()[0].device_kind.lower()
    except Exception:
        return False
    return ("v6" in kind) or ("v7" in kind) or ("7x" in kind)


def _ffn_kernel(x_ref, wgu_ref, wd_ref, o_ref, acc_ref, *, ti, act_dtype):
    # x_ref:   (tm, H)      token tile
    # wgu_ref: (H, 2*ti)    fused [gate_tile | up_tile] weight block
    # wd_ref:  (ti, H)      down_proj weight block
    # o_ref:   (tm, H)      output tile (written on last reduction step)
    # acc_ref: (tm, H) f32  accumulator over the I (reduction) axis
    j = pl.program_id(1)

    x = x_ref[...]
    # One fused MXU pass produces both gate and up activations for this I-tile.
    gu = jnp.dot(x, wgu_ref[...], preferred_element_type=jnp.float32)
    gu = gu.astype(act_dtype)  # bf16 on v6e/v7x with bf16 inputs; f32 otherwise
    g = gu[:, :ti]
    u = gu[:, ti:]
    # SiLU (hidden_act='silu'), then scale by up-projection.
    h = (g * jax.nn.sigmoid(g)) * u
    # Partial down-projection for this I-tile, accumulated in f32.
    partial = jnp.dot(h.astype(wd_ref.dtype), wd_ref[...],
                      preferred_element_type=jnp.float32)

    @pl.when(j == 0)
    def _():
        acc_ref[...] = partial          # direct write: no zero-fill + reload

    @pl.when(j > 0)
    def _():
        acc_ref[...] += partial

    @pl.when(j == pl.num_programs(1) - 1)
    def _():
        o_ref[...] = acc_ref[...].astype(o_ref.dtype)


def prepare_ffn_weights(wg, wu, wd, *, ti=512):
    """One-time weight reformatting. Call at parameter-load time, NOT per step.

    wg, wu: (I, H)  gate_proj / up_proj weights in nn.Linear (out, in) layout
    wd:     (H, I)  down_proj weight in nn.Linear (out, in) layout
    Returns (wgu, wd_t, ti_eff):
      wgu:    (H, 2*Ip)  per-I-tile interleaved [gate_tile_j | up_tile_j]
      wd_t:   (Ip, H)    transposed / zero-padded down_proj weight
      ti_eff: the intermediate tile the layout was built for (pass to feed_forward)
    """
    I, H = wg.shape
    assert wu.shape == (I, H) and wd.shape == (H, I)
    ti_eff = max(128, min(_round_up(ti, 128), _round_up(I, 128)))
    Ip = _round_up(I, ti_eff)
    wg_t, wu_t, wd_t = wg.T, wu.T, wd.T
    if Ip != I:
        # Zero padding of gate/up columns and down rows contributes exactly 0.
        pad = Ip - I
        wg_t = jnp.pad(wg_t, ((0, 0), (0, pad)))
        wu_t = jnp.pad(wu_t, ((0, 0), (0, pad)))
        wd_t = jnp.pad(wd_t, ((0, pad), (0, 0)))
    nI = Ip // ti_eff
    wgu = jnp.concatenate(
        [wg_t.reshape(H, nI, ti_eff), wu_t.reshape(H, nI, ti_eff)], axis=2
    ).reshape(H, 2 * Ip)
    return jax.device_put(wgu), jax.device_put(wd_t), ti_eff


@functools.partial(jax.jit, static_argnames=("tm", "ti"))
def feed_forward(x, wgu, wd_t, *, ti, tm=512):
    """SwiGLU FFN forward.

    x:    (B, S, H)
    wgu:  (H, 2*Ip)  prepared fused weight (from prepare_ffn_weights)
    wd_t: (Ip, H)    prepared down_proj weight
    ti:   intermediate tile the weights were prepared with
    tm:   token tile (rows); default 512 to amortize weight streaming
    """
    B, S, H = x.shape
    Ip, Hd = wd_t.shape
    assert Hd == H and wgu.shape == (H, 2 * Ip)
    assert H % 128 == 0, "hidden_size must be a multiple of 128 (lane width)"
    assert Ip % ti == 0, "ti must match prepare_ffn_weights"

    T = B * S
    x2d = x.reshape(T, H)

    # Align token tile to the dtype sublane tile (8 f32 / 16 bf16 / 32 8-bit).
    itemsize = jnp.dtype(x.dtype).itemsize
    align = {1: 32, 2: 16}.get(itemsize, 8)
    tm_eff = max(align, min(_round_up(tm, align), _round_up(T, align)))
    Tp = _round_up(T, tm_eff)
    if Tp != T:
        x2d = jnp.pad(x2d, ((0, Tp - T), (0, 0)))

    nT = Tp // tm_eff
    nI = Ip // ti

    act_dtype = (jnp.bfloat16
                 if (x.dtype == jnp.bfloat16 and _bf16_elementwise_ok())
                 else jnp.float32)

    w_bytes = jnp.dtype(wgu.dtype).itemsize
    cost = pl.CostEstimate(
        flops=6 * Tp * H * Ip,                 # fused gate+up matmul + down matmul
        transcendentals=Tp * Ip,               # sigmoid
        # Weights are re-streamed once per token tile (nT times).
        bytes_accessed=nT * (2 * H * Ip + Ip * H) * w_bytes
        + 2 * Tp * H * itemsize,
    )

    out2d = pl.pallas_call(
        functools.partial(_ffn_kernel, ti=ti, act_dtype=act_dtype),
        out_shape=jax.ShapeDtypeStruct((Tp, H), x.dtype),
        grid_spec=pltpu.PrefetchScalarGridSpec(
            num_scalar_prefetch=0,
            grid=(nT, nI),
            in_specs=[
                pl.BlockSpec((tm_eff, H), lambda i, j: (i, 0)),      # x tile
                pl.BlockSpec((H, 2 * ti), lambda i, j: (0, j)),      # [gate|up] tile
                pl.BlockSpec((ti, H), lambda i, j: (j, 0)),          # down tile
            ],
            out_specs=pl.BlockSpec((tm_eff, H), lambda i, j: (i, 0)),
            scratch_shapes=[pltpu.VMEM((tm_eff, H), jnp.float32)],   # f32 acc
        ),
        compiler_params=pltpu.CompilerParams(
            dimension_semantics=("parallel", "arbitrary"),
            vmem_limit_bytes=_vmem_limit_bytes(),
        ),
        cost_estimate=cost,
    )(x2d, wgu, wd_t)

    return out2d[:T].reshape(B, S, H)


def reference_ffn(x, wg, wu, wd):
    # wg, wu: (I, H); wd: (H, I)  -- PyTorch nn.Linear layout (out, in). f32 math.
    x = x.astype(jnp.float32)
    g = jnp.einsum("bsh,ih->bsi", x, wg.astype(jnp.float32))
    u = jnp.einsum("bsh,ih->bsi", x, wu.astype(jnp.float32))
    h = (g * jax.nn.sigmoid(g)) * u
    return jnp.einsum("bsi,hi->bsh", h, wd.astype(jnp.float32))


if __name__ == "__main__":
    # Small config consistent with MiniMindConfig's intermediate_size rule:
    # hidden_size=128 -> intermediate = int(128*8/3)=341 -> 64*ceil(341/64)=384
    hidden_size = 128
    intermediate_size = 64 * ((int(hidden_size * 8 / 3) + 63) // 64)  # 384

    def make_case(key, batch, seq, dtype=jnp.float32):
        kx, kg, ku, kd = jax.random.split(key, 4)
        scale = 1.0 / jnp.sqrt(hidden_size)
        xx = jax.random.normal(kx, (batch, seq, hidden_size), jnp.float32)
        wg = jax.random.normal(kg, (intermediate_size, hidden_size), jnp.float32) * scale
        wu = jax.random.normal(ku, (intermediate_size, hidden_size), jnp.float32) * scale
        wd = jax.random.normal(kd, (hidden_size, intermediate_size), jnp.float32) * scale
        return (xx.astype(dtype), wg.astype(dtype), wu.astype(dtype), wd.astype(dtype))

    key = jax.random.PRNGKey(0)
    k1, k2, k3 = jax.random.split(key, 3)

    # Case 1: f32, default tiles (clamped to the tiny shape), single grid step.
    x, wg, wu, wd = make_case(k1, 2, 8)
    wgu, wdt, ti_eff = prepare_ffn_weights(wg, wu, wd)           # one-time prep
    y = jax.block_until_ready(feed_forward(x, wgu, wdt, ti=ti_eff))
    y_ref = reference_ffn(x, wg, wu, wd)
    assert jnp.allclose(y, y_ref, atol=1e-3, rtol=1e-3), "mismatch (case 1)"

    # Case 2: f32, ragged token count + small explicit tiles to exercise the
    # multi-step token axis (tail padding) and the tiled I reduction (nI=3).
    x, wg, wu, wd = make_case(k2, 3, 40)                         # T=120 -> pad to 128
    wgu, wdt, ti_eff = prepare_ffn_weights(wg, wu, wd, ti=128)
    y = jax.block_until_ready(feed_forward(x, wgu, wdt, ti=ti_eff, tm=64))
    y_ref = reference_ffn(x, wg, wu, wd)
    assert jnp.allclose(y, y_ref, atol=1e-3, rtol=1e-3), "mismatch (case 2)"

    # Case 3: bf16 inputs/weights (real-workload dtype), exercises the bf16
    # elementwise path on v6e/v7x and the 16-aligned token tile.
    x, wg, wu, wd = make_case(k3, 2, 16, dtype=jnp.bfloat16)     # T=32
    wgu, wdt, ti_eff = prepare_ffn_weights(wg, wu, wd, ti=128)
    y = jax.block_until_ready(feed_forward(x, wgu, wdt, ti=ti_eff, tm=16))
    y_ref = reference_ffn(x, wg, wu, wd)
    assert jnp.allclose(y.astype(jnp.float32), y_ref, atol=6e-2, rtol=6e-2), \
        "mismatch (case 3, bf16)"

    # TODO(synk): dropout (p=0.0 in config) is an identity and is omitted.
    print("KERNEL_OK")
</pallas_src>

<mosaic_0001>
module attributes {stable_mosaic.version = 11 : i64} {
  func.func @_ffn_kernel(%arg0: i32, %arg1: i32, %arg2: memref<16x128xf32, #tpu.memory_space<vmem>>, %arg3: memref<128x768xf32, #tpu.memory_space<vmem>>, %arg4: memref<384x128xf32, #tpu.memory_space<vmem>>, %arg5: memref<16x128xf32, #tpu.memory_space<vmem>>, %arg6: memref<16x128xf32, #tpu.memory_space<vmem>>) attributes {dimension_semantics = [#tpu.dimension_semantics<parallel>, #tpu.dimension_semantics<arbitrary>], iteration_bounds = array<i64: 1, 1>, scalar_prefetch = 0 : i64, scratch_operands = 1 : i64, tpu.core_type = #tpu.core_type<tc>, window_params = [{transform_indices = @transform_0, window_bounds = array<i64: 16, 128>}, {transform_indices = @transform_1, window_bounds = array<i64: 128, 768>}, {transform_indices = @transform_2, window_bounds = array<i64: 384, 128>}, {transform_indices = @transform_3, window_bounds = array<i64: 16, 128>}]} {
    %c0 = arith.constant 0 : index
    %c0_0 = arith.constant 0 : index
    %0 = vector.load %arg2[%c0, %c0_0] : memref<16x128xf32, #tpu.memory_space<vmem>>, vector<16x128xf32>
    %c0_1 = arith.constant 0 : index
    %c0_2 = arith.constant 0 : index
    %1 = vector.load %arg3[%c0_1, %c0_2] : memref<128x768xf32, #tpu.memory_space<vmem>>, vector<128x768xf32>
    %cst = arith.constant dense<0.000000e+00> : vector<16x768xf32>
    %2 = tpu.matmul %0, %1, %cst {dimension_numbers = #tpu.dot_dimension_numbers<[1], [0], [0], [1], [0, 0, 1, 1], [], []>} : vector<16x128xf32>, vector<128x768xf32>, vector<16x768xf32> -> vector<16x768xf32>
    %3 = vector.extract_strided_slice %2 {offsets = [0, 0], sizes = [16, 384], strides = [1, 1]} : vector<16x768xf32> to vector<16x384xf32>
    %4 = vector.extract_strided_slice %2 {offsets = [0, 384], sizes = [16, 384], strides = [1, 1]} : vector<16x768xf32> to vector<16x384xf32>
    %5 = arith.negf %3 : vector<16x384xf32>
    %6 = math.exp %5 : vector<16x384xf32>
    %cst_3 = arith.constant 1.000000e+00 : f32
    %7 = vector.broadcast %cst_3 : f32 to vector<16x384xf32>
    %8 = arith.addf %7, %6 : vector<16x384xf32>
    %9 = arith.divf %7, %8 : vector<16x384xf32>
    %10 = arith.mulf %3, %9 : vector<16x384xf32>
    %11 = arith.mulf %10, %4 : vector<16x384xf32>
    %c0_4 = arith.constant 0 : index
    %c0_5 = arith.constant 0 : index
    %12 = vector.load %arg4[%c0_4, %c0_5] : memref<384x128xf32, #tpu.memory_space<vmem>>, vector<384x128xf32>
    %cst_6 = arith.constant dense<0.000000e+00> : vector<16x128xf32>
    %13 = tpu.matmul %11, %12, %cst_6 {dimension_numbers = #tpu.dot_dimension_numbers<[1], [0], [0], [1], [0, 0, 1, 1], [], []>} : vector<16x384xf32>, vector<384x128xf32>, vector<16x128xf32> -> vector<16x128xf32>
    %c0_i32 = arith.constant 0 : i32
    %14 = arith.cmpi eq, %arg1, %c0_i32 : i32
    %15 = arith.extui %14 : i1 to i32
    %c0_i32_7 = arith.constant 0 : i32
    %16 = arith.cmpi ne, %15, %c0_i32_7 : i32
    scf.if %16 {
      %c0_12 = arith.constant 0 : index
      %c0_13 = arith.constant 0 : index
      %23 = vector.load %arg6[%c0_12, %c0_13] : memref<16x128xf32, #tpu.memory_space<vmem>>, vector<16x128xf32>
      tpu.vector_store %arg6[%c0_12, %c0_13], %13 {strides = array<i32>} : memref<16x128xf32, #tpu.memory_space<vmem>>, vector<16x128xf32>,
    } else {
    }
    %c0_i32_8 = arith.constant 0 : i32
    %17 = arith.cmpi sgt, %arg1, %c0_i32_8 : i32
    %18 = arith.extui %17 : i1 to i32
    %c0_i32_9 = arith.constant 0 : i32
    %19 = arith.cmpi ne, %18, %c0_i32_9 : i32
    scf.if %19 {
      %c0_12 = arith.constant 0 : index
      %c0_13 = arith.constant 0 : index
      %23 = vector.load %arg6[%c0_12, %c0_13] : memref<16x128xf32, #tpu.memory_space<vmem>>, vector<16x128xf32>
      %24 = arith.addf %23, %13 : vector<16x128xf32>
      %c0_14 = arith.constant 0 : index
      %c0_15 = arith.constant 0 : index
      %25 = vector.load %arg6[%c0_14, %c0_15] : memref<16x128xf32, #tpu.memory_space<vmem>>, vector<16x128xf32>
      tpu.vector_store %arg6[%c0_14, %c0_15], %24 {strides = array<i32>} : memref<16x128xf32, #tpu.memory_space<vmem>>, vector<16x128xf32>,
    } else {
    }
    %c0_i32_10 = arith.constant 0 : i32
    %20 = arith.cmpi eq, %arg1, %c0_i32_10 : i32
    %21 = arith.extui %20 : i1 to i32
    %c0_i32_11 = arith.constant 0 : i32
    %22 = arith.cmpi ne, %21, %c0_i32_11 : i32
    scf.if %22 {
      %c0_12 = arith.constant 0 : index
      %c0_13 = arith.constant 0 : index
      %23 = vector.load %arg6[%c0_12, %c0_13] : memref<16x128xf32, #tpu.memory_space<vmem>>, vector<16x128xf32>
      %c0_14 = arith.constant 0 : index
      %c0_15 = arith.constant 0 : index
      %24 = vector.load %arg5[%c0_14, %c0_15] : memref<16x128xf32, #tpu.memory_space<vmem>>, vector<16x128xf32>
      tpu.vector_store %arg5[%c0_14, %c0_15], %23 {strides = array<i32>} : memref<16x128xf32, #tpu.memory_space<vmem>>, vector<16x128xf32>,
    } else {
    }
    return
  }
  func.func @transform_0(%arg0: i32, %arg1: i32) -> (i32, i32) {
    %c0_i32 = arith.constant 0 : i32
    %c0_i32_0 = arith.constant 0 : i32
    return %arg0, %c0_i32 : i32, i32
  }
  func.func @transform_1(%arg0: i32, %arg1: i32) -> (i32, i32) {
    %c0_i32 = arith.constant 0 : i32
    %c0_i32_0 = arith.constant 0 : i32
    return %c0_i32, %arg1 : i32, i32
  }
  func.func @transform_2(%arg0: i32, %arg1: i32) -> (i32, i32) {
    %c0_i32 = arith.constant 0 : i32
    %c0_i32_0 = arith.constant 0 : i32
    return %arg1, %c0_i32 : i32, i32
  }
  func.func @transform_3(%arg0: i32, %arg1: i32) -> (i32, i32) {
    %c0_i32 = arith.constant 0 : i32
    %c0_i32_0 = arith.constant 0 : i32
    return %arg0, %c0_i32 : i32, i32
  }
}

</mosaic_0001>

<llo_original>
// kernel: feed_forward.1
$region0: #{feed_forward.1}
  #allocation0 [shape = 'u32[]', space=smem, size = 0x4, offset = 0x4, fixed_abs, tag = 'smem constant byte address 0x4 - core index']
  #allocation1 [shape = 'u32[144,128]{1,0:T(1,128)}', space=vmem, size = 0x12000, scoped, tag = 'internal scratch']
  #allocation2 [shape = 'f32[16,128]{1,0:T(8,128)}', space=vmem, size = 0x2000, scoped, tag = 'scratch operand']
  %s0 = inlined_call_operand.hbm [shape: f32[16,128], index: 0, kind: input, shape index: {}]
  %s1 = inlined_call_operand.hbm [shape: f32[128,768], index: 1, kind: input, shape index: {}]
  %s2 = inlined_call_operand.hbm [shape: f32[384,128], index: 2, kind: input, shape index: {}]
  %s3 = inlined_call_operand.hbm [shape: f32[16,128], index: 3, kind: output, shape index: {}]
  %s4 = sld [smem:[#allocation0]]
  $region46: #{feed_forward.1} parent=0
    _
  %s6 = ssub.s32 1, %s4
  %s7 = scalar_select 0, %s6, %s4
  $region1: #{feed_forward.1} parent=0
    #allocation3 [shape = 'u8[8192]{0}', space=vmem, size = 0x2000, scoped, tag = 'input window, operand 0, single buffered']
    #allocation4 [shape = 's32[1]{0}', space=sflag, size = 0x4, scoped, tag = 'scoped memory for feed_forward.1']
    #allocation5 [shape = 's32[1]{0}', space=sflag, size = 0x4, scoped, tag = 'scoped memory for feed_forward.1']
    #allocation6 [shape = 'u8[393216]{0}', space=vmem, size = 0x60000, scoped, tag = 'input window, operand 1, single buffered']
    #allocation7 [shape = 's32[1]{0}', space=sflag, size = 0x4, scoped, tag = 'scoped memory for feed_forward.1']
    #allocation8 [shape = 'u8[196608]{0}', space=vmem, size = 0x30000, scoped, tag = 'input window, operand 2, single buffered']
    #allocation9 [shape = 'u8[8192]{0}', space=vmem, size = 0x2000, scoped, tag = 'output window, operand 0, single buffered']
    %8 = vsyncpa [#allocation4], 0
    %9 = vsyncpa [#allocation7], 0
    %10 = vsyncpa [#allocation5], 0
    // Predicated region
    $region2: #{feed_forward.1} parent=1 // pred_check
      _
    $region3: #{feed_forward.1} parent=1 // pred_check_branch
      %12 = sbr.rel (0) target = $region5
    $region4: #{feed_forward.1} parent=1 // pred_region
      %s14 = ssub.s32 256, 256
      %15 = vsyncadd [#allocation4], %s14
      %s16 = sshll.u32 [#allocation3], 4
      %s17 = int_to_ptr.vmem [resolvable:$true] %s16
      %22 = dma.hbm_to_vmem [thread:$0]  %s0, 256, %s17, [#allocation4], 128, 128, 8
    $region5: #{feed_forward.1} parent=1 // pred_fallthru
      _
    // Predicated region
    $region6: #{feed_forward.1} parent=1 // pred_check
      _
    $region7: #{feed_forward.1} parent=1 // pred_check_branch
      %24 = sbr.rel (0) target = $region9
    $region8: #{feed_forward.1} parent=1 // pred_region
      %s26 = ssub.s32 12288, 12288
      %27 = vsyncadd [#allocation7], %s26
      %s28 = sshll.u32 [#allocation6], 4
      %s29 = int_to_ptr.vmem [resolvable:$true] %s28
      %34 = dma.hbm_to_vmem [thread:$0]  %s1, 12288, %s29, [#allocation7], 768, 768, 48
    $region9: #{feed_forward.1} parent=1 // pred_fallthru
      _
    // Predicated region
    $region10: #{feed_forward.1} parent=1 // pred_check
      _
    $region11: #{feed_forward.1} parent=1 // pred_check_branch
      %36 = sbr.rel (0) target = $region13
    $region12: #{feed_forward.1} parent=1 // pred_region
      %s38 = ssub.s32 6144, 6144
      %39 = vsyncadd [#allocation7], %s38
      %s40 = sshll.u32 [#allocation8], 4
      %s41 = int_to_ptr.vmem [resolvable:$true] %s40
      %46 = dma.hbm_to_vmem [thread:$0]  %s2, 6144, %s41, [#allocation7], 128, 128, 8
    $region13: #{feed_forward.1} parent=1 // pred_fallthru
      _
    // Predicated region
    $region14: #{feed_forward.1} parent=1 // pred_check
      _
    $region15: #{feed_forward.1} parent=1 // pred_check_branch
      %48 = sbr.rel (0) target = $region17
    $region16: #{feed_forward.1} parent=1 // pred_region
      %49 = dma.done [#allocation4], 256
    $region17: #{feed_forward.1} parent=1 // pred_fallthru
      _
    // Predicated region
    $region18: #{feed_forward.1} parent=1 // pred_check
      _
    $region19: #{feed_forward.1} parent=1 // pred_check_branch
      %51 = sbr.rel (0) target = $region21
    $region20: #{feed_forward.1} parent=1 // pred_region
      %52 = dma.done [#allocation7], 12288
    $region21: #{feed_forward.1} parent=1 // pred_fallthru
      _
    // Predicated region
    $region22: #{feed_forward.1} parent=1 // pred_check
      _
    $region23: #{feed_forward.1} parent=1 // pred_check_branch
      %54 = sbr.rel (0) target = $region25
    $region24: #{feed_forward.1} parent=1 // pred_region
      %55 = dma.done [#allocation7], 6144
    $region25: #{feed_forward.1} parent=1 // pred_fallthru
      _
    %v56 = vld [vmem:[#allocation3] sm:$0xff]
    %v57 = vld [vmem:[#allocation3 + $0x8] sm:$0xff]
    %v58 = vld [vmem:[#allocation6] sm:$0xff]
    %v59 = vld [vmem:[#allocation6 + $0x8] sm:$0xff]
    %v60 = vld [vmem:[#allocation6 + $0x10] sm:$0xff]
    %v61 = vld [vmem:[#allocation6 + $0x18] sm:$0xff]
    %v62 = vld [vmem:[#allocation6 + $0x20] sm:$0xff]
    %v63 = vld [vmem:[#allocation6 + $0x28] sm:$0xff]
    %v64 = vld [vmem:[#allocation6 + $0x30] sm:$0xff]
    %v65 = vld [vmem:[#allocation6 + $0x38] sm:$0xff]
    %v66 = vld [vmem:[#allocation6 + $0x40] sm:$0xff]
    %v67 = vld [vmem:[#allocation6 + $0x48] sm:$0xff]
    %v68 = vld [vmem:[#allocation6 + $0x50] sm:$0xff]
    %v69 = vld [vmem:[#allocation6 + $0x58] sm:$0xff]
    %v70 = vld [vmem:[#allocation6 + $0x60] sm:$0xff]
    %v71 = vld [vmem:[#allocation6 + $0x68] sm:$0xff]
    %v72 = vld [vmem:[#allocation6 + $0x70] sm:$0xff]
    %v73 = vld [vmem:[#allocation6 + $0x78] sm:$0xff]
    %v74 = vld [vmem:[#allocation6 + $0x80] sm:$0xff]
    %v75 = vld [vmem:[#allocation6 + $0x88] sm:$0xff]
    %v76 = vld [vmem:[#allocation6 + $0x90] sm:$0xff]
    %v77 = vld [vmem:[#allocation6 + $0x98] sm:$0xff]
    %v78 = vld [vmem:[#allocation6 + $0xa0] sm:$0xff]
    %v79 = vld [vmem:[#allocation6 + $0xa8] sm:$0xff]
    %v80 = vld [vmem:[#allocation6 + $0xb0] sm:$0xff]
    %v81 = vld [vmem:[#allocation6 + $0xb8] sm:$0xff]
    %v82 = vld [vmem:[#allocation6 + $0xc0] sm:$0xff]
    %v83 = vld [vmem:[#allocation6 + $0xc8] sm:$0xff]
    %v84 = vld [vmem:[#allocation6 + $0xd0] sm:$0xff]
    %v85 = vld [vmem:[#allocation6 + $0xd8] sm:$0xff]
    %v86 = vld [vmem:[#allocation6 + $0xe0] sm:$0xff]
    %v87 = vld [vmem:[#allocation6 + $0xe8] sm:$0xff]
    %v88 = vld [vmem:[#allocation6 + $0xf0] sm:$0xff]
    %v89 = vld [vmem:[#allocation6 + $0xf8] sm:$0xff]
    %v90 = vld [vmem:[#allocation6 + $0x100] sm:$0xff]
    %v91 = vld [vmem:[#allocation6 + $0x108] sm:$0xff]
    %v92 = vld [vmem:[#allocation6 + $0x110] sm:$0xff]
    %v93 = vld [vmem:[#allocation6 + $0x118] sm:$0xff]
    %v94 = vld [vmem:[#allocation6 + $0x120] sm:$0xff]
    %v95 = vld [vmem:[#allocation6 + $0x128] sm:$0xff]
    %v96 = vld [vmem:[#allocation6 + $0x130] sm:$0xff]
    %v97 = vld [vmem:[#allocation6 + $0x138] sm:$0xff]
    %v98 = vld [vmem:[#allocation6 + $0x140] sm:$0xff]
    %v99 = vld [vmem:[#allocation6 + $0x148] sm:$0xff]
    %v100 = vld [vmem:[#allocation6 + $0x150] sm:$0xff]
    %v101 = vld [vmem:[#allocation6 + $0x158] sm:$0xff]
    %v102 = vld [vmem:[#allocation6 + $0x160] sm:$0xff]
    %v103 = vld [vmem:[#allocation6 + $0x168] sm:$0xff]
    %v104 = vld [vmem:[#allocation6 + $0x170] sm:$0xff]
    %v105 = vld [vmem:[#allocation6 + $0x178] sm:$0xff]
    %v106 = vld [vmem:[#allocation6 + $0x180] sm:$0xff]
    %v107 = vld [vmem:[#allocation6 + $0x188] sm:$0xff]
    %v108 = vld [vmem:[#allocation6 + $0x190] sm:$0xff]
    %v109 = vld [vmem:[#allocation6 + $0x198] sm:$0xff]
    %v110 = vld [vmem:[#allocation6 + $0x1a0] sm:$0xff]
    %v111 = vld [vmem:[#allocation6 + $0x1a8] sm:$0xff]
    %v112 = vld [vmem:[#allocation6 + $0x1b0] sm:$0xff]
    %v113 = vld [vmem:[#allocation6 + $0x1b8] sm:$0xff]
    %v114 = vld [vmem:[#allocation6 + $0x1c0] sm:$0xff]
    %v115 = vld [vmem:[#allocation6 + $0x1c8] sm:$0xff]
    %v116 = vld [vmem:[#allocation6 + $0x1d0] sm:$0xff]
    %v117 = vld [vmem:[#allocation6 + $0x1d8] sm:$0xff]
    %v118 = vld [vmem:[#allocation6 + $0x1e0] sm:$0xff]
    %v119 = vld [vmem:[#allocation6 + $0x1e8] sm:$0xff]
    %v120 = vld [vmem:[#allocation6 + $0x1f0] sm:$0xff]
    %v121 = vld [vmem:[#allocation6 + $0x1f8] sm:$0xff]
    %v122 = vld [vmem:[#allocation6 + $0x200] sm:$0xff]
    %v123 = vld [vmem:[#allocation6 + $0x208] sm:$0xff]
    %v124 = vld [vmem:[#allocation6 + $0x210] sm:$0xff]
    %v125 = vld [vmem:[#allocation6 + $0x218] sm:$0xff]
    %v126 = vld [vmem:[#allocation6 + $0x220] sm:$0xff]
    %v127 = vld [vmem:[#allocation6 + $0x228] sm:$0xff]
    %v128 = vld [vmem:[#allocation6 + $0x230] sm:$0xff]
    %v129 = vld [vmem:[#allocation6 + $0x238] sm:$0xff]
    %v130 = vld [vmem:[#allocation6 + $0x240] sm:$0xff]
    %v131 = vld [vmem:[#allocation6 + $0x248] sm:$0xff]
    %v132 = vld [vmem:[#allocation6 + $0x250] sm:$0xff]
    %v133 = vld [vmem:[#allocation6 + $0x258] sm:$0xff]
    %v134 = vld [vmem:[#allocation6 + $0x260] sm:$0xff]
    %v135 = vld [vmem:[#allocation6 + $0x268] sm:$0xff]
    %v136 = vld [vmem:[#allocation6 + $0x270] sm:$0xff]
    %v137 = vld [vmem:[#allocation6 + $0x278] sm:$0xff]
    %v138 = vld [vmem:[#allocation6 + $0x280] sm:$0xff]
    %v139 = vld [vmem:[#allocation6 + $0x288] sm:$0xff]
    %v140 = vld [vmem:[#allocation6 + $0x290] sm:$0xff]
    %v141 = vld [vmem:[#allocation6 + $0x298] sm:$0xff]
    %v142 = vld [vmem:[#allocation6 + $0x2a0] sm:$0xff]
    %v143 = vld [vmem:[#allocation6 + $0x2a8] sm:$0xff]
    %v144 = vld [vmem:[#allocation6 + $0x2b0] sm:$0xff]
    %v145 = vld [vmem:[#allocation6 + $0x2b8] sm:$0xff]
    %v146 = vld [vmem:[#allocation6 + $0x2c0] sm:$0xff]
    %v147 = vld [vmem:[#allocation6 + $0x2c8] sm:$0xff]
    %v148 = vld [vmem:[#allocation6 + $0x2d0] sm:$0xff]
    %v149 = vld [vmem:[#allocation6 + $0x2d8] sm:$0xff]
    %v150 = vld [vmem:[#allocation6 + $0x2e0] sm:$0xff]
    %v151 = vld [vmem:[#allocation6 + $0x2e8] sm:$0xff]
    %v152 = vld [vmem:[#allocation6 + $0x2f0] sm:$0xff]
    %v153 = vld [vmem:[#allocation6 + $0x2f8] sm:$0xff]
    %154 = vmatprep.subr.mxu0 %v149
    %155 = vmatpush1.msra.mxu0 %v148
    %156 = vmatprep.subr.mxu0 %v143
    %157 = vmatpush1.msra.mxu0 %v142
    %158 = vmatprep.subr.mxu0 %v137
    %159 = vmatpush1.msra.mxu0 %v136
    %160 = vmatprep.subr.mxu0 %v131
    %161 = vmatpush1.msra.mxu0 %v130
    %162 = vmatprep.subr.mxu0 %v125
    %163 = vmatpush1.msra.mxu0 %v124
    %164 = vmatprep.subr.mxu0 %v119
    %165 = vmatpush1.msra.mxu0 %v118
    %166 = vmatprep.subr.mxu0 %v113
    %167 = vmatpush1.msra.mxu0 %v112
    %168 = vmatprep.subr.mxu0 %v107
    %169 = vmatpush1.msra.mxu0 %v106
    %170 = vmatprep.subr.mxu0 %v101
    %171 = vmatpush1.msra.mxu0 %v100
    %172 = vmatprep.subr.mxu0 %v95
    %173 = vmatpush1.msra.mxu0 %v94
    %174 = vmatprep.subr.mxu0 %v89
    %175 = vmatpush1.msra.mxu0 %v88
    %176 = vmatprep.subr.mxu0 %v83
    %177 = vmatpush1.msra.mxu0 %v82
    %178 = vmatprep.subr.mxu0 %v77
    %179 = vmatpush1.msra.mxu0 %v76
    %180 = vmatprep.subr.mxu0 %v71
    %181 = vmatpush1.msra.mxu0 %v70
    %182 = vmatprep.subr.mxu0 %v65
    %183 = vmatpush1.msra.mxu0 %v64
    %184 = vmatprep.subr.mxu0 %v59
    %185 = vmatpush1.msra.mxu0 %v58
    %186 = vmatprep.subr.mxu0 0.0
    %187 = vmatpush2.msra.mxu0 0.0
    %188 = vmatprep.subr.mxu0 0.0
    %189 = vmatpush2.msra.mxu0 0.0
    %190 = vmatprep.subr.mxu0 0.0
    %191 = vmatpush2.msra.mxu0 0.0
    %192 = vmatprep.subr.mxu0 0.0
    %193 = vmatpush2.msra.mxu0 0.0
    %194 = vmatprep.subr.mxu0 0.0
    %195 = vmatpush2.msra.mxu0 0.0
    %196 = vmatprep.subr.mxu0 0.0
    %197 = vmatpush2.msra.mxu0 0.0
    %198 = vmatprep.subr.mxu0 0.0
    %199 = vmatpush2.msra.mxu0 0.0
    %200 = vmatprep.subr.mxu0 0.0
    %201 = vmatpush2.msra.mxu0 0.0
    %202 = vmatprep.subr.mxu0 0.0
    %203 = vmatpush2.msra.mxu0 0.0
    %204 = vmatprep.subr.mxu0 0.0
    %205 = vmatpush2.msra.mxu0 0.0
    %206 = vmatprep.subr.mxu0 0.0
    %207 = vmatpush2.msra.mxu0 0.0
    %208 = vmatprep.subr.mxu0 0.0
    %209 = vmatpush2.msra.mxu0 0.0
    %210 = vmatprep.subr.mxu0 0.0
    %211 = vmatpush2.msra.mxu0 0.0
    %212 = vmatprep.subr.mxu0 0.0
    %213 = vmatpush2.msra.mxu0 0.0
    %214 = vmatprep.subr.mxu0 0.0
    %215 = vmatpush2.msra.mxu0 0.0
    %216 = vmatprep.subr.mxu0 0.0
    %217 = vmatpush2.msra.mxu0 0.0
    %218 = vmatprep.mubr.f32.mxu0 0.0
    %219 = vmatmul.mubr.f32.gmra.mxu0 %v56
    %v220 = vpop.f32.mrf.mxu0
    %v221 = vadd.f32 0.0, %v220
    %v222 = vpop.f32.mrf.mxu0
    %v223 = vadd.f32 0.0, %v222
    %224 = vmatprep.mubr.f32.mxu0 0.0
    %225 = vmatmul.mubr.f32.gmra.mxu0 %v57
    %v226 = vpop.f32.mrf.mxu0
    %v227 = vadd.f32 0.0, %v226
    %v228 = vpop.f32.mrf.mxu0
    %v229 = vadd.f32 0.0, %v228
    %230 = vdwg.mxu0
    %231 = vmatprep.subr.mxu0 %v151
    %232 = vmatpush1.msra.mxu0 %v150
    %233 = vmatprep.subr.mxu0 %v145
    %234 = vmatpush1.msra.mxu0 %v144
    %235 = vmatprep.subr.mxu0 %v139
    %236 = vmatpush1.msra.mxu0 %v138
    %237 = vmatprep.subr.mxu0 %v133
    %238 = vmatpush1.msra.mxu0 %v132
    %239 = vmatprep.subr.mxu0 %v127
    %240 = vmatpush1.msra.mxu0 %v126
    %241 = vmatprep.subr.mxu0 %v121
    %242 = vmatpush1.msra.mxu0 %v120
    %243 = vmatprep.subr.mxu0 %v115
    %244 = vmatpush1.msra.mxu0 %v114
    %245 = vmatprep.subr.mxu0 %v109
    %246 = vmatpush1.msra.mxu0 %v108
    %247 = vmatprep.subr.mxu0 %v103
    %248 = vmatpush1.msra.mxu0 %v102
    %249 = vmatprep.subr.mxu0 %v97
    %250 = vmatpush1.msra.mxu0 %v96
    %251 = vmatprep.subr.mxu0 %v91
    %252 = vmatpush1.msra.mxu0 %v90
    %253 = vmatprep.subr.mxu0 %v85
    %254 = vmatpush1.msra.mxu0 %v84
    %255 = vmatprep.subr.mxu0 %v79
    %256 = vmatpush1.msra.mxu0 %v78
    %257 = vmatprep.subr.mxu0 %v73
    %258 = vmatpush1.msra.mxu0 %v72
    %259 = vmatprep.subr.mxu0 %v67
    %260 = vmatpush1.msra.mxu0 %v66
    %261 = vmatprep.subr.mxu0 %v61
    %262 = vmatpush1.msra.mxu0 %v60
    %263 = vmatprep.subr.mxu0 0.0
    %264 = vmatpush2.msra.mxu0 0.0
    %265 = vmatprep.subr.mxu0 0.0
    %266 = vmatpush2.msra.mxu0 0.0
    %267 = vmatprep.subr.mxu0 0.0
    %268 = vmatpush2.msra.mxu0 0.0
    %269 = vmatprep.subr.mxu0 0.0
    %270 = vmatpush2.msra.mxu0 0.0
    %271 = vmatprep.subr.mxu0 0.0
    %272 = vmatpush2.msra.mxu0 0.0
    %273 = vmatprep.subr.mxu0 0.0
    %274 = vmatpush2.msra.mxu0 0.0
    %275 = vmatprep.subr.mxu0 0.0
    %276 = vmatpush2.msra.mxu0 0.0
    %277 = vmatprep.subr.mxu0 0.0
    %278 = vmatpush2.msra.mxu0 0.0
    %279 = vmatprep.subr.mxu0 0.0
    %280 = vmatpush2.msra.mxu0 0.0
    %281 = vmatprep.subr.mxu0 0.0
    %282 = vmatpush2.msra.mxu0 0.0
    %283 = vmatprep.subr.mxu0 0.0
    %284 = vmatpush2.msra.mxu0 0.0
    %285 = vmatprep.subr.mxu0 0.0
    %286 = vmatpush2.msra.mxu0 0.0
    %287 = vmatprep.subr.mxu0 0.0
    %288 = vmatpush2.msra.mxu0 0.0
    %289 = vmatprep.subr.mxu0 0.0
    %290 = vmatpush2.msra.mxu0 0.0
    %291 = vmatprep.subr.mxu0 0.0
    %292 = vmatpush2.msra.mxu0 0.0
    %293 = vmatprep.subr.mxu0 0.0
    %294 = vmatpush2.msra.mxu0 0.0
    %295 = vmatprep.mubr.f32.mxu0 0.0
    %296 = vmatmul.mubr.f32.gmra.mxu0 %v56
    %v297 = vpop.f32.mrf.mxu0
    %v298 = vadd.f32 0.0, %v297
    %v299 = vpop.f32.mrf.mxu0
    %v300 = vadd.f32 0.0, %v299
    %301 = vmatprep.mubr.f32.mxu0 0.0
    %302 = vmatmul.mubr.f32.gmra.mxu0 %v57
    %v303 = vpop.f32.mrf.mxu0
    %v304 = vadd.f32 0.0, %v303
    %v305 = vpop.f32.mrf.mxu0
    %v306 = vadd.f32 0.0, %v305
    %307 = vdwg.mxu0
    %308 = vmatprep.subr.mxu0 %v153
    %309 = vmatpush1.msra.mxu0 %v152
    %310 = vmatprep.subr.mxu0 %v147
    %311 = vmatpush1.msra.mxu0 %v146
    %312 = vmatprep.subr.mxu0 %v141
    %313 = vmatpush1.msra.mxu0 %v140
    %314 = vmatprep.subr.mxu0 %v135
    %315 = vmatpush1.msra.mxu0 %v134
    %316 = vmatprep.subr.mxu0 %v129
    %317 = vmatpush1.msra.mxu0 %v128
    %318 = vmatprep.subr.mxu0 %v123
    %319 = vmatpush1.msra.mxu0 %v122
    %320 = vmatprep.subr.mxu0 %v117
    %321 = vmatpush1.msra.mxu0 %v116
    %322 = vmatprep.subr.mxu0 %v111
    %323 = vmatpush1.msra.mxu0 %v110
    %324 = vmatprep.subr.mxu0 %v105
    %325 = vmatpush1.msra.mxu0 %v104
    %326 = vmatprep.subr.mxu0 %v99
    %327 = vmatpush1.msra.mxu0 %v98
    %328 = vmatprep.subr.mxu0 %v93
    %329 = vmatpush1.msra.mxu0 %v92
    %330 = vmatprep.subr.mxu0 %v87
    %331 = vmatpush1.msra.mxu0 %v86
    %332 = vmatprep.subr.mxu0 %v81
    %333 = vmatpush1.msra.mxu0 %v80
    %334 = vmatprep.subr.mxu0 %v75
    %335 = vmatpush1.msra.mxu0 %v74
    %336 = vmatprep.subr.mxu0 %v69
    %337 = vmatpush1.msra.mxu0 %v68
    %338 = vmatprep.subr.mxu0 %v63
    %339 = vmatpush1.msra.mxu0 %v62
    %340 = vmatprep.subr.mxu0 0.0
    %341 = vmatpush2.msra.mxu0 0.0
    %342 = vmatprep.subr.mxu0 0.0
    %343 = vmatpush2.msra.mxu0 0.0
    %344 = vmatprep.subr.mxu0 0.0
    %345 = vmatpush2.msra.mxu0 0.0
    %346 = vmatprep.subr.mxu0 0.0
    %347 = vmatpush2.msra.mxu0 0.0
    %348 = vmatprep.subr.mxu0 0.0
    %349 = vmatpush2.msra.mxu0 0.0
    %350 = vmatprep.subr.mxu0 0.0
    %351 = vmatpush2.msra.mxu0 0.0
    %352 = vmatprep.subr.mxu0 0.0
    %353 = vmatpush2.msra.mxu0 0.0
    %354 = vmatprep.subr.mxu0 0.0
    %355 = vmatpush2.msra.mxu0 0.0
    %356 = vmatprep.subr.mxu0 0.0
    %357 = vmatpush2.msra.mxu0 0.0
    %358 = vmatprep.subr.mxu0 0.0
    %359 = vmatpush2.msra.mxu0 0.0
    %360 = vmatprep.subr.mxu0 0.0
    %361 = vmatpush2.msra.mxu0 0.0
    %362 = vmatprep.subr.mxu0 0.0
    %363 = vmatpush2.msra.mxu0 0.0
    %364 = vmatprep.subr.mxu0 0.0
    %365 = vmatpush2.msra.mxu0 0.0
    %366 = vmatprep.subr.mxu0 0.0
    %367 = vmatpush2.msra.mxu0 0.0
    %368 = vmatprep.subr.mxu0 0.0
    %369 = vmatpush2.msra.mxu0 0.0
    %370 = vmatprep.subr.mxu0 0.0
    %371 = vmatpush2.msra.mxu0 0.0
    %372 = vmatprep.mubr.f32.mxu0 0.0
    %373 = vmatmul.mubr.f32.gmra.mxu0 %v56
    %v374 = vpop.f32.mrf.mxu0
    %v375 = vadd.f32 0.0, %v374
    %v376 = vpop.f32.mrf.mxu0
    %v377 = vadd.f32 0.0, %v376
    %378 = vmatprep.mubr.f32.mxu0 0.0
    %379 = vmatmul.mubr.f32.gmra.mxu0 %v57
    %v380 = vpop.f32.mrf.mxu0
    %v381 = vadd.f32 0.0, %v380
    %v382 = vpop.f32.mrf.mxu0
    %v383 = vadd.f32 0.0, %v382
    %384 = vdwg.mxu0
    %v385 = vxor.u32 %v221, 2147483648
    %v386 = vxor.u32 %v223, 2147483648
    %v387 = vxor.u32 %v298, 2147483648
    %v388 = vxor.u32 %v227, 2147483648
    %v389 = vxor.u32 %v229, 2147483648
    %v390 = vxor.u32 %v304, 2147483648
    %v391 = vmul.f32 %v385, 1.442695
    %v392 = vpow.pop %v391
    %v393 = vmul.f32 %v386, 1.442695
    %v394 = vpow.pop %v393
    %v395 = vmul.f32 %v387, 1.442695
    %v396 = vpow.pop %v395
    %v397 = vmul.f32 %v388, 1.442695
    %v398 = vpow.pop %v397
    %v399 = vmul.f32 %v389, 1.442695
    %v400 = vpow.pop %v399
    %v401 = vmul.f32 %v390, 1.442695
    %v402 = vpow.pop %v401
    %v403 = vadd.f32 %v392, 1.0
    %v404 = vadd.f32 %v394, 1.0
    %v405 = vadd.f32 %v396, 1.0
    %v406 = vadd.f32 %v398, 1.0
    %v407 = vadd.f32 %v400, 1.0
    %v408 = vadd.f32 %v402, 1.0
    %v409 = vrcp.pop %v403
    %v410 = vmul.f32 1.0, %v409
    %v411 = vrcp.pop %v404
    %v412 = vmul.f32 1.0, %v411
    %v413 = vrcp.pop %v405
    %v414 = vmul.f32 1.0, %v413
    %v415 = vrcp.pop %v406
    %v416 = vmul.f32 1.0, %v415
    %v417 = vrcp.pop %v407
    %v418 = vmul.f32 1.0, %v417
    %v419 = vrcp.pop %v408
    %v420 = vmul.f32 1.0, %v419
    %v421 = vmul.f32 %v221, %v410
    %v422 = vmul.f32 %v223, %v412
    %v423 = vmul.f32 %v298, %v414
    %v424 = vmul.f32 %v227, %v416
    %v425 = vmul.f32 %v229, %v418
    %v426 = vmul.f32 %v304, %v420
    %v427 = vmul.f32 %v421, %v300
    %v428 = vmul.f32 %v422, %v375
    %v429 = vmul.f32 %v423, %v377
    %v430 = vmul.f32 %v424, %v306
    %v431 = vmul.f32 %v425, %v381
    %v432 = vmul.f32 %v426, %v383
    %v433 = vld [vmem:[#allocation8] sm:$0xff]
    %v434 = vld [vmem:[#allocation8 + $0x8] sm:$0xff]
    %v435 = vld [vmem:[#allocation8 + $0x10] sm:$0xff]
    %v436 = vld [vmem:[#allocation8 + $0x18] sm:$0xff]
    %v437 = vld [vmem:[#allocation8 + $0x20] sm:$0xff]
    %v438 = vld [vmem:[#allocation8 + $0x28] sm:$0xff]
    %v439 = vld [vmem:[#allocation8 + $0x30] sm:$0xff]
    %v440 = vld [vmem:[#allocation8 + $0x38] sm:$0xff]
    %v441 = vld [vmem:[#allocation8 + $0x40] sm:$0xff]
    %v442 = vld [vmem:[#allocation8 + $0x48] sm:$0xff]
    %v443 = vld [vmem:[#allocation8 + $0x50] sm:$0xff]
    %v444 = vld [vmem:[#allocation8 + $0x58] sm:$0xff]
    %v445 = vld [vmem:[#allocation8 + $0x60] sm:$0xff]
    %v446 = vld [vmem:[#allocation8 + $0x68] sm:$0xff]
    %v447 = vld [vmem:[#allocation8 + $0x70] sm:$0xff]
    %v448 = vld [vmem:[#allocation8 + $0x78] sm:$0xff]
    %v449 = vld [vmem:[#allocation8 + $0x80] sm:$0xff]
    %v450 = vld [vmem:[#allocation8 + $0x88] sm:$0xff]
    %v451 = vld [vmem:[#allocation8 + $0x90] sm:$0xff]
    %v452 = vld [vmem:[#allocation8 + $0x98] sm:$0xff]
    %v453 = vld [vmem:[#allocation8 + $0xa0] sm:$0xff]
    %v454 = vld [vmem:[#allocation8 + $0xa8] sm:$0xff]
    %v455 = vld [vmem:[#allocation8 + $0xb0] sm:$0xff]
    %v456 = vld [vmem:[#allocation8 + $0xb8] sm:$0xff]
    %v457 = vld [vmem:[#allocation8 + $0xc0] sm:$0xff]
    %v458 = vld [vmem:[#allocation8 + $0xc8] sm:$0xff]
    %v459 = vld [vmem:[#allocation8 + $0xd0] sm:$0xff]
    %v460 = vld [vmem:[#allocation8 + $0xd8] sm:$0xff]
    %v461 = vld [vmem:[#allocation8 + $0xe0] sm:$0xff]
    %v462 = vld [vmem:[#allocation8 + $0xe8] sm:$0xff]
    %v463 = vld [vmem:[#allocation8 + $0xf0] sm:$0xff]
    %v464 = vld [vmem:[#allocation8 + $0xf8] sm:$0xff]
    %v465 = vld [vmem:[#allocation8 + $0x100] sm:$0xff]
    %v466 = vld [vmem:[#allocation8 + $0x108] sm:$0xff]
    %v467 = vld [vmem:[#allocation8 + $0x110] sm:$0xff]
    %v468 = vld [vmem:[#allocation8 + $0x118] sm:$0xff]
    %v469 = vld [vmem:[#allocation8 + $0x120] sm:$0xff]
    %v470 = vld [vmem:[#allocation8 + $0x128] sm:$0xff]
    %v471 = vld [vmem:[#allocation8 + $0x130] sm:$0xff]
    %v472 = vld [vmem:[#allocation8 + $0x138] sm:$0xff]
    %v473 = vld [vmem:[#allocation8 + $0x140] sm:$0xff]
    %v474 = vld [vmem:[#allocation8 + $0x148] sm:$0xff]
    %v475 = vld [vmem:[#allocation8 + $0x150] sm:$0xff]
    %v476 = vld [vmem:[#allocation8 + $0x158] sm:$0xff]
    %v477 = vld [vmem:[#allocation8 + $0x160] sm:$0xff]
    %v478 = vld [vmem:[#allocation8 + $0x168] sm:$0xff]
    %v479 = vld [vmem:[#allocation8 + $0x170] sm:$0xff]
    %v480 = vld [vmem:[#allocation8 + $0x178] sm:$0xff]
    %481 = vmatprep.subr.mxu0 0.0
    %482 = vmatpush1.msra.mxu0 %v448
    %483 = vmatprep.subr.mxu0 0.0
    %484 = vmatpush1.msra.mxu0 %v447
    %485 = vmatprep.subr.mxu0 0.0
    %486 = vmatpush1.msra.mxu0 %v446
    %487 = vmatprep.subr.mxu0 0.0
    %488 = vmatpush1.msra.mxu0 %v445
    %489 = vmatprep.subr.mxu0 0.0
    %490 = vmatpush1.msra.mxu0 %v444
    %491 = vmatprep.subr.mxu0 0.0
    %492 = vmatpush1.msra.mxu0 %v443
    %493 = vmatprep.subr.mxu0 0.0
    %494 = vmatpush1.msra.mxu0 %v442
    %495 = vmatprep.subr.mxu0 0.0
    %496 = vmatpush1.msra.mxu0 %v441
    %497 = vmatprep.subr.mxu0 0.0
    %498 = vmatpush1.msra.mxu0 %v440
    %499 = vmatprep.subr.mxu0 0.0
    %500 = vmatpush1.msra.mxu0 %v439
    %501 = vmatprep.subr.mxu0 0.0
    %502 = vmatpush1.msra.mxu0 %v438
    %503 = vmatprep.subr.mxu0 0.0
    %504 = vmatpush1.msra.mxu0 %v437
    %505 = vmatprep.subr.mxu0 0.0
    %506 = vmatpush1.msra.mxu0 %v436
    %507 = vmatprep.subr.mxu0 0.0
    %508 = vmatpush1.msra.mxu0 %v435
    %509 = vmatprep.subr.mxu0 0.0
    %510 = vmatpush1.msra.mxu0 %v434
    %511 = vmatprep.subr.mxu0 0.0
    %512 = vmatpush1.msra.mxu0 %v433
    %513 = vmatprep.subr.mxu0 0.0
    %514 = vmatpush2.msra.mxu0 %v464
    %515 = vmatprep.subr.mxu0 0.0
    %516 = vmatpush2.msra.mxu0 %v463
    %517 = vmatprep.subr.mxu0 0.0
    %518 = vmatpush2.msra.mxu0 %v462
    %519 = vmatprep.subr.mxu0 0.0
    %520 = vmatpush2.msra.mxu0 %v461
    %521 = vmatprep.subr.mxu0 0.0
    %522 = vmatpush2.msra.mxu0 %v460
    %523 = vmatprep.subr.mxu0 0.0
    %524 = vmatpush2.msra.mxu0 %v459
    %525 = vmatprep.subr.mxu0 0.0
    %526 = vmatpush2.msra.mxu0 %v458
    %527 = vmatprep.subr.mxu0 0.0
    %528 = vmatpush2.msra.mxu0 %v457
    %529 = vmatprep.subr.mxu0 0.0
    %530 = vmatpush2.msra.mxu0 %v456
    %531 = vmatprep.subr.mxu0 0.0
    %532 = vmatpush2.msra.mxu0 %v455
    %533 = vmatprep.subr.mxu0 0.0
    %534 = vmatpush2.msra.mxu0 %v454
    %535 = vmatprep.subr.mxu0 0.0
    %536 = vmatpush2.msra.mxu0 %v453
    %537 = vmatprep.subr.mxu0 0.0
    %538 = vmatpush2.msra.mxu0 %v452
    %539 = vmatprep.subr.mxu0 0.0
    %540 = vmatpush2.msra.mxu0 %v451
    %541 = vmatprep.subr.mxu0 0.0
    %542 = vmatpush2.msra.mxu0 %v450
    %543 = vmatprep.subr.mxu0 0.0
    %544 = vmatpush2.msra.mxu0 %v449
    %545 = vmatprep.mubr.f32.mxu0 %v428
    %546 = vmatmul.mubr.f32.gmra.mxu0 %v427
    %v547 = vpop.f32.mrf.mxu0
    %v548 = vadd.f32 0.0, %v547
    %v549 = vpop.f32.mrf.mxu0
    %550 = vmatprep.mubr.f32.mxu0 %v431
    %551 = vmatmul.mubr.f32.gmra.mxu0 %v430
    %v552 = vpop.f32.mrf.mxu0
    %v553 = vadd.f32 0.0, %v552
    %v554 = vpop.f32.mrf.mxu0
    %555 = vdwg.mxu0
    %556 = vmatprep.subr.mxu0 0.0
    %557 = vmatpush1.msra.mxu0 %v480
    %558 = vmatprep.subr.mxu0 0.0
    %559 = vmatpush1.msra.mxu0 %v479
    %560 = vmatprep.subr.mxu0 0.0
    %561 = vmatpush1.msra.mxu0 %v478
    %562 = vmatprep.subr.mxu0 0.0
    %563 = vmatpush1.msra.mxu0 %v477
    %564 = vmatprep.subr.mxu0 0.0
    %565 = vmatpush1.msra.mxu0 %v476
    %566 = vmatprep.subr.mxu0 0.0
    %567 = vmatpush1.msra.mxu0 %v475
    %568 = vmatprep.subr.mxu0 0.0
    %569 = vmatpush1.msra.mxu0 %v474
    %570 = vmatprep.subr.mxu0 0.0
    %571 = vmatpush1.msra.mxu0 %v473
    %572 = vmatprep.subr.mxu0 0.0
    %573 = vmatpush1.msra.mxu0 %v472
    %574 = vmatprep.subr.mxu0 0.0
    %575 = vmatpush1.msra.mxu0 %v471
    %576 = vmatprep.subr.mxu0 0.0
    %577 = vmatpush1.msra.mxu0 %v470
    %578 = vmatprep.subr.mxu0 0.0
    %579 = vmatpush1.msra.mxu0 %v469
    %580 = vmatprep.subr.mxu0 0.0
    %581 = vmatpush1.msra.mxu0 %v468
    %582 = vmatprep.subr.mxu0 0.0
    %583 = vmatpush1.msra.mxu0 %v467
    %584 = vmatprep.subr.mxu0 0.0
    %585 = vmatpush1.msra.mxu0 %v466
    %586 = vmatprep.subr.mxu0 0.0
    %587 = vmatpush1.msra.mxu0 %v465
    %588 = vmatprep.subr.mxu0 0.0
    %589 = vmatpush2.msra.mxu0 0.0
    %590 = vmatprep.subr.mxu0 0.0
    %591 = vmatpush2.msra.mxu0 0.0
    %592 = vmatprep.subr.mxu0 0.0
    %593 = vmatpush2.msra.mxu0 0.0
    %594 = vmatprep.subr.mxu0 0.0
    %595 = vmatpush2.msra.mxu0 0.0
    %596 = vmatprep.subr.mxu0 0.0
    %597 = vmatpush2.msra.mxu0 0.0
    %598 = vmatprep.subr.mxu0 0.0
    %599 = vmatpush2.msra.mxu0 0.0
    %600 = vmatprep.subr.mxu0 0.0
    %601 = vmatpush2.msra.mxu0 0.0
    %602 = vmatprep.subr.mxu0 0.0
    %603 = vmatpush2.msra.mxu0 0.0
    %604 = vmatprep.subr.mxu0 0.0
    %605 = vmatpush2.msra.mxu0 0.0
    %606 = vmatprep.subr.mxu0 0.0
    %607 = vmatpush2.msra.mxu0 0.0
    %608 = vmatprep.subr.mxu0 0.0
    %609 = vmatpush2.msra.mxu0 0.0
    %610 = vmatprep.subr.mxu0 0.0
    %611 = vmatpush2.msra.mxu0 0.0
    %612 = vmatprep.subr.mxu0 0.0
    %613 = vmatpush2.msra.mxu0 0.0
    %614 = vmatprep.subr.mxu0 0.0
    %615 = vmatpush2.msra.mxu0 0.0
    %616 = vmatprep.subr.mxu0 0.0
    %617 = vmatpush2.msra.mxu0 0.0
    %618 = vmatprep.subr.mxu0 0.0
    %619 = vmatpush2.msra.mxu0 0.0
    %620 = vmatprep.mubr.f32.mxu0 0.0
    %621 = vmatmul.mubr.f32.gmra.mxu0 %v429
    %v622 = vpop.f32.mrf.mxu0
    %v623 = vadd.f32 %v548, %v622
    %v624 = vpop.f32.mrf.mxu0
    %625 = vmatprep.mubr.f32.mxu0 0.0
    %626 = vmatmul.mubr.f32.gmra.mxu0 %v432
    %v627 = vpop.f32.mrf.mxu0
    %v628 = vadd.f32 %v553, %v627
    %v629 = vpop.f32.mrf.mxu0
    %630 = vdwg.mxu0
    %p631 = scmp.eq.s32.totalorder 0, 0
    // Predicated region
    $region26: #{feed_forward.1} parent=1 // pred_check
      %p632 = pneg %p631
    $region27: #{feed_forward.1} parent=1 // pred_check_branch
      %634 = sbr.rel (%p632) target = $region29
    $region28: #{feed_forward.1} parent=1 // pred_region
      %635 = vst [vmem:[#allocation2] sm:$0xff] %v623
      %636 = vst [vmem:[#allocation2 + $0x8] sm:$0xff] %v628
    $region29: #{feed_forward.1} parent=1 // pred_fallthru
      _
    %p637 = scmp.gt.s32.totalorder 0, 0
    // Predicated region
    $region30: #{feed_forward.1} parent=1 // pred_check
      %p638 = pneg %p637
    $region31: #{feed_forward.1} parent=1 // pred_check_branch
      %640 = sbr.rel (%p638) target = $region33
    $region32: #{feed_forward.1} parent=1 // pred_region
      %v641 = vld [vmem:[#allocation2] sm:$0xff]
      %v642 = vld [vmem:[#allocation2 + $0x8] sm:$0xff]
      %v643 = vadd.f32 %v641, %v623
      %v644 = vadd.f32 %v642, %v628
      %645 = vst [vmem:[#allocation2] sm:$0xff] %v643
      %646 = vst [vmem:[#allocation2 + $0x8] sm:$0xff] %v644
    $region33: #{feed_forward.1} parent=1 // pred_fallthru
      _
    // Predicated region
    $region34: #{feed_forward.1} parent=1 // pred_check
      %p647 = pneg %p631
    $region35: #{feed_forward.1} parent=1 // pred_check_branch
      %649 = sbr.rel (%p647) target = $region37
    $region36: #{feed_forward.1} parent=1 // pred_region
      %v650 = vld [vmem:[#allocation2] sm:$0xff]
      %v651 = vld [vmem:[#allocation2 + $0x8] sm:$0xff]
      %652 = vst [vmem:[#allocation9] sm:$0xff] %v650
      %653 = vst [vmem:[#allocation9 + $0x8] sm:$0xff] %v651
    $region37: #{feed_forward.1} parent=1 // pred_fallthru
      _
    // Predicated region
    $region38: #{feed_forward.1} parent=1 // pred_check
      _
    $region39: #{feed_forward.1} parent=1 // pred_check_branch
      %655 = sbr.rel (0) target = $region41
    $region40: #{feed_forward.1} parent=1 // pred_region
      %s657 = ssub.s32 256, 256
      %658 = vsyncadd [#allocation5], %s657
      %s659 = sshll.u32 [#allocation9], 4
      %s660 = int_to_ptr.vmem [resolvable:$true] %s659
      %665 = dma.vmem_to_hbm [thread:$0]  %s660, 256, %s3, [#allocation5], 128, 128, 8
    $region41: #{feed_forward.1} parent=1 // pred_fallthru
      _
    // Predicated region
    $region42: #{feed_forward.1} parent=1 // pred_check
      _
    $region43: #{feed_forward.1} parent=1 // pred_check_branch
      %667 = sbr.rel (0) target = $region45
    $region44: #{feed_forward.1} parent=1 // pred_region
      %668 = dma.done [#allocation5], 256
    $region45: #{feed_forward.1} parent=1 // pred_fallthru
      _
    %669 = vsyncpa [#allocation4], 1
    %670 = vsyncpa [#allocation7], 1
    %671 = vsyncpa [#allocation5], 1

</llo_original>
